<compile_context>
chip_gen: v5e
topology: v5e:2x2
jax: 0.10.0
libtpu: 0.0.40
codegen_flags: <defaults>
</compile_context>

<pallas_src>
import functools

import jax
import jax.numpy as jnp
from jax.experimental import pallas as pl
from jax.experimental.pallas import tpu as pltpu

IN_CHANNELS = 16
OUT_CHANNELS = 16

_VMEM_LIMIT = 32 * 1024 * 1024  # safe on v5e/v6e/v7x (v7x physical VMEM is 64 MiB)


# ----------------------------- Pallas kernels ---------------------------------
def _feat_transform_kernel(x_ref, w_ref, out_ref):
    """out = X @ W for one row tile (tiny-K matmul, kept out of the A-propagation K loop)."""
    x = x_ref[...].astype(jnp.bfloat16)
    w = w_ref[...].astype(jnp.bfloat16)
    out_ref[...] = jnp.dot(x, w, preferred_element_type=jnp.float32).astype(out_ref.dtype)


def _gcn_prop_kernel(a_ref, xw_ref, b_ref, out_ref, acc_ref, *, apply_relu):
    """acc[i] += A[i, k] @ XW[k]; on last K step add bias (+ ReLU) and store."""
    k = pl.program_id(1)

    @pl.when(k == 0)
    def _():
        acc_ref[...] = jnp.zeros_like(acc_ref)

    acc_ref[...] += jnp.dot(a_ref[...], xw_ref[...], preferred_element_type=jnp.float32)

    @pl.when(k == pl.num_programs(1) - 1)
    def _():
        r = acc_ref[...] + b_ref[...]
        if apply_relu:
            r = jnp.maximum(r, 0.0)
        out_ref[...] = r.astype(out_ref.dtype)


def _decoder_kernel(idx_ref, z_ref, wdec_ref, bdec_ref, out_ref, prod_ref, *, num_edges):
    """Gather z[src]*z[dst] by index (no one-hot matmuls), reduce against the
    decoder weight with an NT matmul to produce a lane-dense (1, E_pad) row."""
    # Zero the gather scratch so padded edge lanes are well-defined.
    prod_ref[...] = jnp.zeros_like(prod_ref)

    # Static unroll over the (small) edge list; indices come from SMEM.
    # TODO(synk): for large E this loop should become a grid axis over edge tiles.
    for e in range(num_edges):
        s = idx_ref[0, e]
        d = idx_ref[1, e]
        prod_ref[e:e + 1, :] = z_ref[pl.ds(s, 1), :] * z_ref[pl.ds(d, 1), :]

    # logits[1, E_pad] = wdec[1, C] . prod[E_pad, C]^T  (contract the channel axis)
    logits = jax.lax.dot_general(
        wdec_ref[...], prod_ref[...],
        dimension_numbers=(((1,), (1,)), ((), ())),
        preferred_element_type=jnp.float32)
    out_ref[...] = jax.nn.sigmoid(logits + bdec_ref[0, 0])


# ------------------------------- glue (JAX) -----------------------------------
def _gcn_normalized_adjacency(edge_index, num_nodes):
    """Dense D^-1/2 (A + I) D^-1/2 with A[dst, src] = 1 (matches PyG gcn_norm)."""
    loops = jnp.arange(num_nodes, dtype=edge_index.dtype)
    src = jnp.concatenate([edge_index[0], loops])
    dst = jnp.concatenate([edge_index[1], loops])
    adj = jnp.zeros((num_nodes, num_nodes), jnp.float32).at[dst, src].add(1.0)
    deg = adj.sum(axis=1)
    dinv = jnp.where(deg > 0, 1.0 / jnp.sqrt(deg), 0.0)
    return dinv[:, None] * adj * dinv[None, :]


def _gcn_layer(a_pad_bf16, x, w, b, *, tile, apply_relu, out_dtype):
    """One GCNConv layer: out = act(A_norm @ (X @ W) + b), tiled over (rows, K)."""
    n_pad = a_pad_bf16.shape[0]
    c_in, c_out = w.shape

    # (1) feature transform, once per row tile (hoisted out of the K loop)
    xw = pl.pallas_call(
        _feat_transform_kernel,
        out_shape=jax.ShapeDtypeStruct((n_pad, c_out), jnp.bfloat16),
        grid=(n_pad // tile,),
        in_specs=[pl.BlockSpec((tile, c_in), lambda i: (i, 0)),
                  pl.BlockSpec((c_in, c_out), lambda i: (0, 0))],
        out_specs=pl.BlockSpec((tile, c_out), lambda i: (i, 0)),
        compiler_params=pltpu.CompilerParams(
            dimension_semantics=("parallel",),
            vmem_limit_bytes=_VMEM_LIMIT),
    )(x, w)

    # (2) propagation: accumulate A[i, k] @ XW[k] over K, bias/activation at the end
    kernel = functools.partial(_gcn_prop_kernel, apply_relu=apply_relu)
    out = pl.pallas_call(
        kernel,
        out_shape=jax.ShapeDtypeStruct((n_pad, c_out), out_dtype),
        grid=(n_pad // tile, n_pad // tile),
        in_specs=[pl.BlockSpec((tile, tile), lambda i, k: (i, k)),
                  pl.BlockSpec((tile, c_out), lambda i, k: (k, 0)),
                  pl.BlockSpec((1, c_out), lambda i, k: (0, 0))],
        out_specs=pl.BlockSpec((tile, c_out), lambda i, k: (i, 0)),
        scratch_shapes=[pltpu.VMEM((tile, c_out), jnp.float32)],
        compiler_params=pltpu.CompilerParams(
            dimension_semantics=("parallel", "arbitrary"),
            vmem_limit_bytes=_VMEM_LIMIT),
    )(a_pad_bf16, xw, b)
    return out


def init_params(key, num_nodes, in_channels, out_channels):
    hidden = 2 * out_channels
    ks = jax.random.split(key, 5)

    def glorot(k, shape):
        a = jnp.sqrt(6.0 / (shape[0] + shape[1]))
        return jax.random.uniform(k, shape, jnp.float32, -a, a)

    emb = jax.random.normal(ks[0], (num_nodes, in_channels), jnp.float32)  # Embedding weight
    w1 = glorot(ks[1], (in_channels, hidden))                              # GCNConv1 weight
    b1 = jnp.zeros((1, hidden), jnp.float32)
    w2 = glorot(ks[2], (hidden, out_channels))                             # GCNConv2 weight
    b2 = jnp.zeros((1, out_channels), jnp.float32)
    bound = 1.0 / jnp.sqrt(jnp.float32(out_channels))
    wdec = jax.random.uniform(ks[3], (1, out_channels), jnp.float32, -bound, bound)
    bdec = jax.random.uniform(ks[4], (1, 1), jnp.float32, -bound, bound)
    return dict(emb=emb, w1=w1, b1=b1, w2=w2, b2=b2, wdec=wdec, bdec=bdec)


def link_prediction_forward(edge_index, params, num_nodes):
    in_ch = params["emb"].shape[1]
    num_edges = edge_index.shape[1]

    # Pad node dim to a lane-aligned multiple of 128; pick the largest tile that divides it.
    n_pad = ((num_nodes + 127) // 128) * 128
    tile = 512 if n_pad % 512 == 0 else (256 if n_pad % 256 == 0 else 128)

    # TODO(synk): for very large graphs, build adjacency tiles on the fly (CSR + scalar
    # prefetch) instead of materializing the dense (N, N) matrix in HBM.
    a_norm = _gcn_normalized_adjacency(edge_index, num_nodes)
    a_pad = jnp.zeros((n_pad, n_pad), jnp.bfloat16)
    a_pad = a_pad.at[:num_nodes, :num_nodes].set(a_norm.astype(jnp.bfloat16))

    emb_pad = jnp.zeros((n_pad, in_ch), jnp.float32).at[:num_nodes].set(params["emb"])

    # Encoder (x = arange(N) -> embedding table itself).
    h = _gcn_layer(a_pad, emb_pad, params["w1"], params["b1"],
                   tile=tile, apply_relu=True, out_dtype=jnp.bfloat16)
    # TODO(synk): Dropout(p=0.8) omitted (inference / eval-mode semantics: identity).
    z = _gcn_layer(a_pad, h, params["w2"], params["b2"],
                   tile=tile, apply_relu=False, out_dtype=jnp.float32)

    # Decoder: index-gather + inner product + sigmoid, lane-dense (1, E_pad) output.
    e_pad = ((num_edges + 127) // 128) * 128
    dec_kernel = functools.partial(_decoder_kernel, num_edges=num_edges)
    smem = pl.BlockSpec(memory_space=pltpu.MemorySpace.SMEM)
    vmem = pl.BlockSpec(memory_space=pltpu.MemorySpace.VMEM)
    out = pl.pallas_call(
        dec_kernel,
        out_shape=jax.ShapeDtypeStruct((1, e_pad), jnp.float32),
        in_specs=[smem, vmem, vmem, smem],
        out_specs=vmem,
        scratch_shapes=[pltpu.VMEM((e_pad, params["wdec"].shape[1]), jnp.float32)],
        compiler_params=pltpu.CompilerParams(vmem_limit_bytes=_VMEM_LIMIT),
    )(edge_index.astype(jnp.int32), z, params["wdec"], params["bdec"])

    return out[0, :num_edges]  # (E,)


if __name__ == "__main__":
    num_nodes = 32
    num_edges = 8

    key = jax.random.PRNGKey(0)
    k_edges, k_params = jax.random.split(key)
    edge_index = jax.random.randint(k_edges, (2, num_edges), 0, num_nodes, dtype=jnp.int32)
    params = init_params(k_params, num_nodes, IN_CHANNELS, OUT_CHANNELS)

    preds = link_prediction_forward(edge_index, params, num_nodes)
    preds = jax.block_until_ready(preds)

    assert preds.shape == (num_edges,)
    assert bool(jnp.all(jnp.isfinite(preds)))
    assert bool(jnp.all((preds >= 0.0) & (preds <= 1.0)))
    print("KERNEL_OK")
</pallas_src>

<mosaic_0001>
module attributes {stable_mosaic.version = 11 : i64} {
  func.func @_feat_transform_kernel(%arg0: i32, %arg1: memref<128x16xf32, #tpu.memory_space<vmem>>, %arg2: memref<16x32xf32, #tpu.memory_space<vmem>>, %arg3: memref<128x32xbf16, #tpu.memory_space<vmem>>) attributes {dimension_semantics = [#tpu.dimension_semantics<parallel>], iteration_bounds = array<i64: 1>, scalar_prefetch = 0 : i64, scratch_operands = 0 : i64, tpu.core_type = #tpu.core_type<tc>, window_params = [{transform_indices = @transform_0, window_bounds = array<i64: 128, 16>}, {pipeline_mode = #tpu.pipeline_mode<synchronous>, transform_indices = @transform_1, window_bounds = array<i64: 16, 32>}, {transform_indices = @transform_2, window_bounds = array<i64: 128, 32>}]} {
    %c0 = arith.constant 0 : index
    %c0_0 = arith.constant 0 : index
    %0 = vector.load %arg1[%c0, %c0_0] : memref<128x16xf32, #tpu.memory_space<vmem>>, vector<128x16xf32>
    %1 = arith.truncf %0 : vector<128x16xf32> to vector<128x16xbf16>
    %c0_1 = arith.constant 0 : index
    %c0_2 = arith.constant 0 : index
    %2 = vector.load %arg2[%c0_1, %c0_2] : memref<16x32xf32, #tpu.memory_space<vmem>>, vector<16x32xf32>
    %3 = arith.truncf %2 : vector<16x32xf32> to vector<16x32xbf16>
    %cst = arith.constant dense<0.000000e+00> : vector<128x32xf32>
    %4 = tpu.matmul %1, %3, %cst {dimension_numbers = #tpu.dot_dimension_numbers<[1], [0], [0], [1], [0, 0, 1, 1], [], []>} : vector<128x16xbf16>, vector<16x32xbf16>, vector<128x32xf32> -> vector<128x32xf32>
    %5 = arith.truncf %4 : vector<128x32xf32> to vector<128x32xbf16>
    %c0_3 = arith.constant 0 : index
    %c0_4 = arith.constant 0 : index
    %6 = vector.load %arg3[%c0_3, %c0_4] : memref<128x32xbf16, #tpu.memory_space<vmem>>, vector<128x32xbf16>
    tpu.vector_store %arg3[%c0_3, %c0_4], %5 {strides = array<i32>} : memref<128x32xbf16, #tpu.memory_space<vmem>>, vector<128x32xbf16>,
    return
  }
  func.func @transform_0(%arg0: i32) -> (i32, i32) {
    %c0_i32 = arith.constant 0 : i32
    %c0_i32_0 = arith.constant 0 : i32
    return %arg0, %c0_i32 : i32, i32
  }
  func.func @transform_1(%arg0: i32) -> (i32, i32) {
    %c0_i32 = arith.constant 0 : i32
    %c0_i32_0 = arith.constant 0 : i32
    %c0_i32_1 = arith.constant 0 : i32
    return %c0_i32, %c0_i32_0 : i32, i32
  }
  func.func @transform_2(%arg0: i32) -> (i32, i32) {
    %c0_i32 = arith.constant 0 : i32
    %c0_i32_0 = arith.constant 0 : i32
    return %arg0, %c0_i32 : i32, i32
  }
}

</mosaic_0001>

<llo_original>
// kernel: tpu_custom_call.1
$region0: #{tpu_custom_call.1}
  #allocation0 [shape = 'u32[]', space=smem, size = 0x4, offset = 0x4, fixed_abs, tag = 'smem constant byte address 0x4 - core index']
  #allocation1 [shape = 'u32[72,128]{1,0:T(1,128)}', space=vmem, size = 0x9000, scoped, tag = 'internal scratch']
  %s0 = inlined_call_operand.vmem [shape: f32[128,16], index: 0, kind: input, shape index: {}]
  %s1 = inlined_call_operand.vmem [shape: f32[16,32], index: 1, kind: input, shape index: {}]
  %s2 = inlined_call_operand.vmem [shape: bf16[128,32], index: 2, kind: output, shape index: {}]
  %s3 = sld [smem:[#allocation0]]
  $region18: #{tpu_custom_call.1} parent=0
    _
  %s5 = ssub.s32 1, %s3
  %s6 = scalar_select 0, %s5, %s3
  // Predicated region
  $region2: #{tpu_custom_call.1} parent=0 // pred_check
    _
  $region3: #{tpu_custom_call.1} parent=0 // pred_check_branch
    %8 = sbr.rel (0) target = $region5
  $region4: #{tpu_custom_call.1} parent=0 // pred_region
    _
  $region5: #{tpu_custom_call.1} parent=0 // pred_fallthru
    _
  // Predicated region
  $region6: #{tpu_custom_call.1} parent=0 // pred_check
    _
  $region7: #{tpu_custom_call.1} parent=0 // pred_check_branch
    %10 = sbr.rel (0) target = $region9
  $region8: #{tpu_custom_call.1} parent=0 // pred_region
    _
  $region9: #{tpu_custom_call.1} parent=0 // pred_fallthru
    _
  %v12 = vld [vmem:[%s0] sm:$0xff]
  %v13 = vld [vmem:[%s0 + $0x8] sm:$0xff]
  %v14 = vld [vmem:[%s0 + $0x10] sm:$0xff]
  %v15 = vld [vmem:[%s0 + $0x18] sm:$0xff]
  %v16 = vld [vmem:[%s0 + $0x20] sm:$0xff]
  %v17 = vld [vmem:[%s0 + $0x28] sm:$0xff]
  %v18 = vld [vmem:[%s0 + $0x30] sm:$0xff]
  %v19 = vld [vmem:[%s0 + $0x38] sm:$0xff]
  %v20 = vld [vmem:[%s0 + $0x40] sm:$0xff]
  %v21 = vld [vmem:[%s0 + $0x48] sm:$0xff]
  %v22 = vld [vmem:[%s0 + $0x50] sm:$0xff]
  %v23 = vld [vmem:[%s0 + $0x58] sm:$0xff]
  %v24 = vld [vmem:[%s0 + $0x60] sm:$0xff]
  %v25 = vld [vmem:[%s0 + $0x68] sm:$0xff]
  %v26 = vld [vmem:[%s0 + $0x70] sm:$0xff]
  %v27 = vld [vmem:[%s0 + $0x78] sm:$0xff]
  %v28 = vpack.c.bf16 %v13, %v12
  %v29 = vpack.c.bf16 %v15, %v14
  %v30 = vpack.c.bf16 %v17, %v16
  %v31 = vpack.c.bf16 %v19, %v18
  %v32 = vpack.c.bf16 %v21, %v20
  %v33 = vpack.c.bf16 %v23, %v22
  %v34 = vpack.c.bf16 %v25, %v24
  %v35 = vpack.c.bf16 %v27, %v26
  %v36 = vld [vmem:[%s1] sm:$0xff]
  %v37 = vld [vmem:[%s1 + $0x8] sm:$0xff]
  %v38 = vpack.c.bf16 %v37, %v36
  %vm39 = vcmask 130048
  %v41 = vsel %vm39, %v28, 0
  %v44 = vsel %vm39, %v29, 0
  %v47 = vsel %vm39, %v30, 0
  %v50 = vsel %vm39, %v31, 0
  %v53 = vsel %vm39, %v32, 0
  %v56 = vsel %vm39, %v33, 0
  %v59 = vsel %vm39, %v34, 0
  %v62 = vsel %vm39, %v35, 0
  %64 = vmatpush.bf16.msra.mxu0 0
  %65 = vmatpush.bf16.msra.mxu0 0
  %66 = vmatpush.bf16.msra.mxu0 0
  %67 = vmatpush.bf16.msra.mxu0 0
  %68 = vmatpush.bf16.msra.mxu0 0
  %69 = vmatpush.bf16.msra.mxu0 0
  %70 = vmatpush.bf16.msra.mxu0 0
  %71 = vmatpush.bf16.msra.mxu0 %v38
  %72 = vmatmul.bf16.gmra.mxu0 %v41
  %v73 = vpop.f32.mrf.mxu0
  %v74 = vadd.f32 0.0, %v73
  %v75 = vpop.f32.mrf.mxu0
  %v76 = vadd.f32 0.0, %v75
  %77 = vmatmul.bf16.gmra.mxu0 %v44
  %v78 = vpop.f32.mrf.mxu0
  %v79 = vadd.f32 0.0, %v78
  %v80 = vpop.f32.mrf.mxu0
  %v81 = vadd.f32 0.0, %v80
  %82 = vmatmul.bf16.gmra.mxu0 %v47
  %v83 = vpop.f32.mrf.mxu0
  %v84 = vadd.f32 0.0, %v83
  %v85 = vpop.f32.mrf.mxu0
  %v86 = vadd.f32 0.0, %v85
  %87 = vmatmul.bf16.gmra.mxu0 %v50
  %v88 = vpop.f32.mrf.mxu0
  %v89 = vadd.f32 0.0, %v88
  %v90 = vpop.f32.mrf.mxu0
  %v91 = vadd.f32 0.0, %v90
  %92 = vmatmul.bf16.gmra.mxu0 %v53
  %v93 = vpop.f32.mrf.mxu0
  %v94 = vadd.f32 0.0, %v93
  %v95 = vpop.f32.mrf.mxu0
  %v96 = vadd.f32 0.0, %v95
  %97 = vmatmul.bf16.gmra.mxu0 %v56
  %v98 = vpop.f32.mrf.mxu0
  %v99 = vadd.f32 0.0, %v98
  %v100 = vpop.f32.mrf.mxu0
  %v101 = vadd.f32 0.0, %v100
  %102 = vmatmul.bf16.gmra.mxu0 %v59
  %v103 = vpop.f32.mrf.mxu0
  %v104 = vadd.f32 0.0, %v103
  %v105 = vpop.f32.mrf.mxu0
  %v106 = vadd.f32 0.0, %v105
  %107 = vmatmul.bf16.gmra.mxu0 %v62
  %v108 = vpop.f32.mrf.mxu0
  %v109 = vadd.f32 0.0, %v108
  %v110 = vpop.f32.mrf.mxu0
  %v111 = vadd.f32 0.0, %v110
  %112 = vdwg.mxu0
  %v113 = vpack.c.bf16 %v74, %v74
  %v114 = vpack.c.bf16 %v76, %v76
  %v115 = vpack.c.bf16 %v79, %v79
  %v116 = vpack.c.bf16 %v81, %v81
  %v117 = vpack.c.bf16 %v84, %v84
  %v118 = vpack.c.bf16 %v86, %v86
  %v119 = vpack.c.bf16 %v89, %v89
  %v120 = vpack.c.bf16 %v91, %v91
  %v121 = vpack.c.bf16 %v94, %v94
  %v122 = vpack.c.bf16 %v96, %v96
  %v123 = vpack.c.bf16 %v99, %v99
  %v124 = vpack.c.bf16 %v101, %v101
  %v125 = vpack.c.bf16 %v104, %v104
  %v126 = vpack.c.bf16 %v106, %v106
  %v127 = vpack.c.bf16 %v109, %v109
  %v128 = vpack.c.bf16 %v111, %v111
  %vm129 = vcmask 257024
  %130 = vst.msk [vmem:[%s2] sm:$0xf] %vm129, %v113
  %131 = vst.msk [vmem:[%s2 + $0x4] sm:$0xf] %vm129, %v114
  %132 = vst.msk [vmem:[%s2 + $0x8] sm:$0xf] %vm129, %v115
  %133 = vst.msk [vmem:[%s2 + $0xc] sm:$0xf] %vm129, %v116
  %134 = vst.msk [vmem:[%s2 + $0x10] sm:$0xf] %vm129, %v117
  %135 = vst.msk [vmem:[%s2 + $0x14] sm:$0xf] %vm129, %v118
  %136 = vst.msk [vmem:[%s2 + $0x18] sm:$0xf] %vm129, %v119
  %137 = vst.msk [vmem:[%s2 + $0x1c] sm:$0xf] %vm129, %v120
  %138 = vst.msk [vmem:[%s2 + $0x20] sm:$0xf] %vm129, %v121
  %139 = vst.msk [vmem:[%s2 + $0x24] sm:$0xf] %vm129, %v122
  %140 = vst.msk [vmem:[%s2 + $0x28] sm:$0xf] %vm129, %v123
  %141 = vst.msk [vmem:[%s2 + $0x2c] sm:$0xf] %vm129, %v124
  %142 = vst.msk [vmem:[%s2 + $0x30] sm:$0xf] %vm129, %v125
  %143 = vst.msk [vmem:[%s2 + $0x34] sm:$0xf] %vm129, %v126
  %144 = vst.msk [vmem:[%s2 + $0x38] sm:$0xf] %vm129, %v127
  %145 = vst.msk [vmem:[%s2 + $0x3c] sm:$0xf] %vm129, %v128
  // Predicated region
  $region10: #{tpu_custom_call.1} parent=0 // pred_check
    _
  $region11: #{tpu_custom_call.1} parent=0 // pred_check_branch
    %147 = sbr.rel (0) target = $region13
  $region12: #{tpu_custom_call.1} parent=0 // pred_region
    _
  $region13: #{tpu_custom_call.1} parent=0 // pred_fallthru
    _
  // Predicated region
  $region14: #{tpu_custom_call.1} parent=0 // pred_check
    _
  $region15: #{tpu_custom_call.1} parent=0 // pred_check_branch
    %149 = sbr.rel (0) target = $region17
  $region16: #{tpu_custom_call.1} parent=0 // pred_region
    _
  $region17: #{tpu_custom_call.1} parent=0 // pred_fallthru
    _

</llo_original>
